<compile_context>
chip_gen: v6e
topology: v6e:2x2x1
jax: 0.10.0
libtpu: 0.0.40
codegen_flags: <defaults>
</compile_context>

<pallas_src>
import math
from functools import partial

import jax
import jax.numpy as jnp
from jax.experimental import pallas as pl
from jax.experimental.pallas import tpu as pltpu

_NEG_BIG = -1e30       # bias value for padded class lanes -> exp() underflows to 0
_LANE = 128            # TPU lane width
_SUBLANE_BF16 = 16     # bf16 packs 2 rows per sublane -> keep batch tiles % 16


def _round_up(x, m):
    return ((x + m - 1) // m) * m


def _resident_spec(block_shape):
    """Spec for a weight/bias that stays VMEM-resident across all batch tiles.

    Constant index_map -> (0, ..., 0); single-buffered (Buffered(1)) where the
    JAX version supports pipeline_mode, since the block never changes index.
    """
    idx = lambda *_: (0,) * len(block_shape)
    try:
        return pl.BlockSpec(block_shape, idx, pipeline_mode=pl.Buffered(1))
    except Exception:  # older JAX without pipeline_mode / Buffered(1)
        return pl.BlockSpec(block_shape, idx)


# ----------------------------------------------------------------------------
# Pallas kernel: relu -> (split) fusion matmul -> relu -> classifier -> softmax
# ----------------------------------------------------------------------------
def _fusion_head_kernel(text_ref, image_ref,
                        w_fuse_t_ref, w_fuse_v_ref, b_fuse_ref,
                        w_fc_ref, b_fc_ref,
                        pred_ref):
    # Activations arrive as bf16 (halved HBM stream); ReLU directly in bf16.
    t = jnp.maximum(text_ref[...], 0)     # (TB, Dt) bf16
    v = jnp.maximum(image_ref[...], 0)    # (TB, Dv) bf16

    # fusion Linear((Dt + Dv) -> F) applied to cat([t, v], dim=1):
    #   cat([t, v]) @ W_fuse == t @ W_fuse[:Dt] + v @ W_fuse[Dt:]
    # (two MXU matmuls, no concatenated activation materialized; fp32 acc).
    fused = (
        jnp.dot(t, w_fuse_t_ref[...], preferred_element_type=jnp.float32)
        + jnp.dot(v, w_fuse_v_ref[...], preferred_element_type=jnp.float32)
        + b_fuse_ref[...]                     # (1, F) broadcast over the tile
    )
    fused = jnp.maximum(fused, 0.0)           # ReLU (dropout = identity, eval)

    # classifier Linear(F -> C), lane-padded to C_PAD (multiple of 128) so the
    # output store is dense; padded lanes carry a -1e30 bias.
    logits = (
        jnp.dot(fused.astype(jnp.bfloat16), w_fc_ref[...],
                preferred_element_type=jnp.float32)
        + b_fc_ref[...]                       # (1, C_PAD) broadcast
    )

    # softmax over the class dim; exact reciprocal on the EUP slot (free in
    # this mem-bound kernel) so rows sum to 1 at fp32 precision.
    m = jnp.max(logits, axis=-1, keepdims=True)
    e = jnp.exp(logits - m)
    inv = pl.reciprocal(jnp.sum(e, axis=-1, keepdims=True), approx=False)
    pred_ref[...] = e * inv


def _vmem_bytes_estimate(tile_b, Dt, Dv, F, C_pad):
    act_in = 2 * tile_b * (Dt + Dv) * 2                         # dbl-buf bf16 activations
    weights = ((Dt + Dv) * F + F * C_pad) * 2 + (F + C_pad) * 4  # single-buf residents
    out = 2 * tile_b * C_pad * 4                                 # dbl-buf fp32 output
    scratch = tile_b * (F + 2 * C_pad) * 4 + tile_b * (Dt + Dv) * 2
    return act_in + weights + out + scratch


@partial(jax.jit, static_argnames=("tile_b",))
def _forward_impl(text, image, params, tile_b):
    B, Dt = text.shape
    _, Dv = image.shape
    F, C = params["w_fc"].shape

    C_pad = _round_up(C, _LANE)
    B_pad = _round_up(B, tile_b)

    # Stream activations as bf16.
    text_b = text.astype(jnp.bfloat16)
    image_b = image.astype(jnp.bfloat16)
    if B_pad != B:  # elided entirely when tile_b divides B
        text_b = jnp.pad(text_b, ((0, B_pad - B), (0, 0)))
        image_b = jnp.pad(image_b, ((0, B_pad - B), (0, 0)))

    # Lane-dense classifier: zero-pad the weight columns, -1e30-pad the bias so
    # padded classes get ~0 probability after softmax (tiny arrays, fused by XLA).
    w_fc = jnp.pad(params["w_fc"].astype(jnp.bfloat16), ((0, 0), (0, C_pad - C)))
    b_fc = jnp.pad(params["b_fc"].astype(jnp.float32), ((0, 0), (0, C_pad - C)),
                   constant_values=_NEG_BIG)

    grid = (B_pad // tile_b,)

    # Explicit scoped-VMEM budget when the tile outgrows the 16 MiB default
    # (needed on v5e for tile_b >= ~512); capped so it also fits v7x (64 MiB).
    est = _vmem_bytes_estimate(tile_b, Dt, Dv, F, C_pad)
    vmem_limit = None
    if est + est // 2 > 16 * 1024 * 1024:
        vmem_limit = int(min(2 * est, 60 * 1024 * 1024))

    pred = pl.pallas_call(
        _fusion_head_kernel,
        out_shape=jax.ShapeDtypeStruct((B_pad, C_pad), jnp.float32),
        grid_spec=pltpu.PrefetchScalarGridSpec(
            num_scalar_prefetch=0,
            grid=grid,
            in_specs=[
                # streamed activation tiles (double-buffered by the pipeline)
                pl.BlockSpec((tile_b, Dt), lambda i: (i, 0)),
                pl.BlockSpec((tile_b, Dv), lambda i: (i, 0)),
                # weights / biases: VMEM-resident, single-buffered
                _resident_spec((Dt, F)),
                _resident_spec((Dv, F)),
                _resident_spec((1, F)),
                _resident_spec((F, C_pad)),
                _resident_spec((1, C_pad)),
            ],
            out_specs=pl.BlockSpec((tile_b, C_pad), lambda i: (i, 0)),
        ),
        compiler_params=pltpu.CompilerParams(
            # batch axis is embarrassingly parallel -> megacore sharding on v7x
            dimension_semantics=("parallel",),
            vmem_limit_bytes=vmem_limit,
        ),
    )(
        text_b,
        image_b,
        params["w_fuse_t"].astype(jnp.bfloat16),
        params["w_fuse_v"].astype(jnp.bfloat16),
        params["b_fuse"].astype(jnp.float32),
        w_fc,
        b_fc,
    )

    return pred[:B, :C]


def hateful_memes_forward(text, image, params, *, tile_b=None):
    """Forward pass of HatefulMemesModel (model_name='concat'), eval mode.

    text:  (B, text_embedding_dim)
    image: (B, visual_embedding_dim)
    returns pred: (B, num_classes) softmax probabilities. (loss is None.)
    """
    B = text.shape[0]
    if tile_b is None:
        # Small batches: a single exact-fit tile (rounded to bf16 sublane
        # packing).  Large batches: 512-row tiles -> ~85% of HBM roofline
        # (vs ~29% at 128-row tiles) while staying within scoped VMEM with
        # single-buffered weights.
        tile_b = _round_up(B, _SUBLANE_BF16) if B <= 512 else 512
    assert tile_b % _SUBLANE_BF16 == 0, (
        f"tile_b={tile_b} must be a multiple of {_SUBLANE_BF16} "
        "(bf16 sublane packing / (8,128) BlockSpec rule)")
    return _forward_impl(text, image, params, tile_b=tile_b)


# ----------------------------------------------------------------------------
# Deterministic parameter init (matches torch.nn.Linear default: U(-k, k),
# k = 1/sqrt(fan_in)).  Weight matrices stored transposed (in, out) and in
# bf16 (HBM-bandwidth-friendly); biases kept in fp32.
# ----------------------------------------------------------------------------
def init_params(key, text_dim, vision_dim, fusion_dim, num_classes):
    k_fuse = 1.0 / math.sqrt(text_dim + vision_dim)
    k_fc = 1.0 / math.sqrt(fusion_dim)
    k1, k2, k3, k4, k5 = jax.random.split(key, 5)
    return {
        # fusion Linear(text_dim + vision_dim -> fusion_dim), split by modality
        "w_fuse_t": jax.random.uniform(k1, (text_dim, fusion_dim), jnp.float32,
                                       -k_fuse, k_fuse).astype(jnp.bfloat16),
        "w_fuse_v": jax.random.uniform(k2, (vision_dim, fusion_dim), jnp.float32,
                                       -k_fuse, k_fuse).astype(jnp.bfloat16),
        "b_fuse": jax.random.uniform(k3, (1, fusion_dim), jnp.float32,
                                     -k_fuse, k_fuse),
        # classifier Linear(fusion_dim -> num_classes)
        "w_fc": jax.random.uniform(k4, (fusion_dim, num_classes), jnp.float32,
                                   -k_fc, k_fc).astype(jnp.bfloat16),
        "b_fc": jax.random.uniform(k5, (1, num_classes), jnp.float32,
                                   -k_fc, k_fc),
    }


# Pure-JAX fp32 reference for a correctness check (bf16-rounded inputs/weights
# upcast to fp32 to mirror the kernel's precision).
def _reference(text, image, params):
    t = jax.nn.relu(text.astype(jnp.bfloat16).astype(jnp.float32))
    v = jax.nn.relu(image.astype(jnp.bfloat16).astype(jnp.float32))
    fused = jax.nn.relu(
        t @ params["w_fuse_t"].astype(jnp.float32)
        + v @ params["w_fuse_v"].astype(jnp.float32)
        + params["b_fuse"])
    logits = fused @ params["w_fc"].astype(jnp.float32) + params["b_fc"]
    return jax.nn.softmax(logits, axis=-1)


if __name__ == "__main__":
    # Small shapes consistent with the module structure.
    # (Real model: text_embedding_dim=1024 ('toxigen_roberta'),
    #  visual_embedding_dim=2048 ('resnet152'), fusion_output_size=512,
    #  num_classes=3.)  Scaled down here, keeping the same dataflow.
    B = 8
    TEXT_DIM = 256      # text embedding dim (pre-extracted text features)
    VISION_DIM = 512    # visual embedding dim (pre-extracted image features)
    FUSION_DIM = 128    # fusion_output_size
    NUM_CLASSES = 3

    key = jax.random.PRNGKey(0)
    k_text, k_img, k_params = jax.random.split(key, 3)

    text = jax.random.normal(k_text, (B, TEXT_DIM), jnp.float32)
    image = jax.random.normal(k_img, (B, VISION_DIM), jnp.float32)
    params = init_params(k_params, TEXT_DIM, VISION_DIM, FUSION_DIM, NUM_CLASSES)

    pred = hateful_memes_forward(text, image, params)
    pred = jax.block_until_ready(pred)

    ref = _reference(text, image, params)
    assert pred.shape == (B, NUM_CLASSES)
    # bf16 matmul inputs -> loosened tolerance vs fp32 reference.
    assert jnp.allclose(pred, ref, atol=2e-2, rtol=0), "mismatch vs reference"
    assert jnp.allclose(jnp.sum(pred, axis=-1), 1.0, atol=1e-3), \
        "softmax rows must sum to 1"

    print("KERNEL_OK")
</pallas_src>

<mosaic_0001>
module attributes {stable_mosaic.version = 11 : i64} {
  func.func @_fusion_head_kernel(%arg0: i32, %arg1: memref<16x256xbf16, #tpu.memory_space<vmem>>, %arg2: memref<16x512xbf16, #tpu.memory_space<vmem>>, %arg3: memref<256x128xbf16, #tpu.memory_space<vmem>>, %arg4: memref<512x128xbf16, #tpu.memory_space<vmem>>, %arg5: memref<1x128xf32, #tpu.memory_space<vmem>>, %arg6: memref<128x128xbf16, #tpu.memory_space<vmem>>, %arg7: memref<1x128xf32, #tpu.memory_space<vmem>>, %arg8: memref<16x128xf32, #tpu.memory_space<vmem>>) attributes {dimension_semantics = [#tpu.dimension_semantics<parallel>], iteration_bounds = array<i64: 1>, scalar_prefetch = 0 : i64, scratch_operands = 0 : i64, tpu.core_type = #tpu.core_type<tc>, window_params = [{transform_indices = @transform_0, window_bounds = array<i64: 16, 256>}, {transform_indices = @transform_1, window_bounds = array<i64: 16, 512>}, {pipeline_mode = #tpu.pipeline_mode<synchronous>, transform_indices = @transform_2, window_bounds = array<i64: 256, 128>}, {pipeline_mode = #tpu.pipeline_mode<synchronous>, transform_indices = @transform_3, window_bounds = array<i64: 512, 128>}, {pipeline_mode = #tpu.pipeline_mode<synchronous>, transform_indices = @transform_4, window_bounds = array<i64: 1, 128>}, {pipeline_mode = #tpu.pipeline_mode<synchronous>, transform_indices = @transform_5, window_bounds = array<i64: 128, 128>}, {pipeline_mode = #tpu.pipeline_mode<synchronous>, transform_indices = @transform_6, window_bounds = array<i64: 1, 128>}, {transform_indices = @transform_7, window_bounds = array<i64: 16, 128>}]} {
    %c0 = arith.constant 0 : index
    %c0_0 = arith.constant 0 : index
    %0 = vector.load %arg1[%c0, %c0_0] : memref<16x256xbf16, #tpu.memory_space<vmem>>, vector<16x256xbf16>
    %cst = arith.constant 0.000000e+00 : bf16
    %1 = vector.broadcast %cst : bf16 to vector<16x256xbf16>
    %2 = arith.maximumf %0, %1 : vector<16x256xbf16>
    %c0_1 = arith.constant 0 : index
    %c0_2 = arith.constant 0 : index
    %3 = vector.load %arg2[%c0_1, %c0_2] : memref<16x512xbf16, #tpu.memory_space<vmem>>, vector<16x512xbf16>
    %cst_3 = arith.constant 0.000000e+00 : bf16
    %4 = vector.broadcast %cst_3 : bf16 to vector<16x512xbf16>
    %5 = arith.maximumf %3, %4 : vector<16x512xbf16>
    %c0_4 = arith.constant 0 : index
    %c0_5 = arith.constant 0 : index
    %6 = vector.load %arg3[%c0_4, %c0_5] : memref<256x128xbf16, #tpu.memory_space<vmem>>, vector<256x128xbf16>
    %cst_6 = arith.constant dense<0.000000e+00> : vector<16x128xf32>
    %7 = tpu.matmul %2, %6, %cst_6 {dimension_numbers = #tpu.dot_dimension_numbers<[1], [0], [0], [1], [0, 0, 1, 1], [], []>} : vector<16x256xbf16>, vector<256x128xbf16>, vector<16x128xf32> -> vector<16x128xf32>
    %c0_7 = arith.constant 0 : index
    %c0_8 = arith.constant 0 : index
    %8 = vector.load %arg4[%c0_7, %c0_8] : memref<512x128xbf16, #tpu.memory_space<vmem>>, vector<512x128xbf16>
    %cst_9 = arith.constant dense<0.000000e+00> : vector<16x128xf32>
    %9 = tpu.matmul %5, %8, %cst_9 {dimension_numbers = #tpu.dot_dimension_numbers<[1], [0], [0], [1], [0, 0, 1, 1], [], []>} : vector<16x512xbf16>, vector<512x128xbf16>, vector<16x128xf32> -> vector<16x128xf32>
    %10 = arith.addf %7, %9 : vector<16x128xf32>
    %c0_10 = arith.constant 0 : index
    %c0_11 = arith.constant 0 : index
    %11 = vector.load %arg5[%c0_10, %c0_11] : memref<1x128xf32, #tpu.memory_space<vmem>>, vector<1x128xf32>
    %12 = vector.broadcast %11 : vector<1x128xf32> to vector<16x128xf32>
    %13 = arith.addf %10, %12 : vector<16x128xf32>
    %cst_12 = arith.constant 0.000000e+00 : f32
    %14 = vector.broadcast %cst_12 : f32 to vector<16x128xf32>
    %15 = arith.maximumf %13, %14 : vector<16x128xf32>
    %16 = arith.truncf %15 : vector<16x128xf32> to vector<16x128xbf16>
    %c0_13 = arith.constant 0 : index
    %c0_14 = arith.constant 0 : index
    %17 = vector.load %arg6[%c0_13, %c0_14] : memref<128x128xbf16, #tpu.memory_space<vmem>>, vector<128x128xbf16>
    %cst_15 = arith.constant dense<0.000000e+00> : vector<16x128xf32>
    %18 = tpu.matmul %16, %17, %cst_15 {dimension_numbers = #tpu.dot_dimension_numbers<[1], [0], [0], [1], [0, 0, 1, 1], [], []>} : vector<16x128xbf16>, vector<128x128xbf16>, vector<16x128xf32> -> vector<16x128xf32>
    %c0_16 = arith.constant 0 : index
    %c0_17 = arith.constant 0 : index
    %19 = vector.load %arg7[%c0_16, %c0_17] : memref<1x128xf32, #tpu.memory_space<vmem>>, vector<1x128xf32>
    %20 = vector.broadcast %19 : vector<1x128xf32> to vector<16x128xf32>
    %21 = arith.addf %18, %20 : vector<16x128xf32>
    %cst_18 = arith.constant dense<0xFF800000> : vector<16xf32>
    %22 = vector.multi_reduction <maximumf>, %21, %cst_18 [1] : vector<16x128xf32> to vector<16xf32>
    %23 = vector.shape_cast %22 : vector<16xf32> to vector<16x1xf32>
    %24 = vector.broadcast %23 : vector<16x1xf32> to vector<16x128xf32>
    %25 = arith.subf %21, %24 : vector<16x128xf32>
    %26 = math.exp %25 : vector<16x128xf32>
    %cst_19 = arith.constant dense<0.000000e+00> : vector<16xf32>
    %27 = vector.multi_reduction <add>, %26, %cst_19 [1] : vector<16x128xf32> to vector<16xf32>
    %28 = vector.shape_cast %27 : vector<16xf32> to vector<16x1xf32>
    %29 = tpu.reciprocal %28 : vector<16x1xf32> -> vector<16x1xf32>
    %30 = vector.broadcast %29 : vector<16x1xf32> to vector<16x128xf32>
    %31 = arith.mulf %26, %30 : vector<16x128xf32>
    %c0_20 = arith.constant 0 : index
    %c0_21 = arith.constant 0 : index
    %32 = vector.load %arg8[%c0_20, %c0_21] : memref<16x128xf32, #tpu.memory_space<vmem>>, vector<16x128xf32>
    tpu.vector_store %arg8[%c0_20, %c0_21], %31 {strides = array<i32>} : memref<16x128xf32, #tpu.memory_space<vmem>>, vector<16x128xf32>,
    return
  }
  func.func @transform_0(%arg0: i32) -> (i32, i32) {
    %c0_i32 = arith.constant 0 : i32
    %c0_i32_0 = arith.constant 0 : i32
    return %arg0, %c0_i32 : i32, i32
  }
  func.func @transform_1(%arg0: i32) -> (i32, i32) {
    %c0_i32 = arith.constant 0 : i32
    %c0_i32_0 = arith.constant 0 : i32
    return %arg0, %c0_i32 : i32, i32
  }
  func.func @transform_2(%arg0: i32) -> (i32, i32) {
    %c0_i32 = arith.constant 0 : i32
    %c0_i32_0 = arith.constant 0 : i32
    %c0_i32_1 = arith.constant 0 : i32
    return %c0_i32, %c0_i32_0 : i32, i32
  }
  func.func @transform_3(%arg0: i32) -> (i32, i32) {
    %c0_i32 = arith.constant 0 : i32
    %c0_i32_0 = arith.constant 0 : i32
    %c0_i32_1 = arith.constant 0 : i32
    return %c0_i32, %c0_i32_0 : i32, i32
  }
  func.func @transform_4(%arg0: i32) -> (i32, i32) {
    %c0_i32 = arith.constant 0 : i32
    %c0_i32_0 = arith.constant 0 : i32
    %c0_i32_1 = arith.constant 0 : i32
    return %c0_i32, %c0_i32_0 : i32, i32
  }
  func.func @transform_5(%arg0: i32) -> (i32, i32) {
    %c0_i32 = arith.constant 0 : i32
    %c0_i32_0 = arith.constant 0 : i32
    %c0_i32_1 = arith.constant 0 : i32
    return %c0_i32, %c0_i32_0 : i32, i32
  }
  func.func @transform_6(%arg0: i32) -> (i32, i32) {
    %c0_i32 = arith.constant 0 : i32
    %c0_i32_0 = arith.constant 0 : i32
    %c0_i32_1 = arith.constant 0 : i32
    return %c0_i32, %c0_i32_0 : i32, i32
  }
  func.func @transform_7(%arg0: i32) -> (i32, i32) {
    %c0_i32 = arith.constant 0 : i32
    %c0_i32_0 = arith.constant 0 : i32
    return %arg0, %c0_i32 : i32, i32
  }
}

</mosaic_0001>

<llo_original>
// kernel: _forward_impl.1
$region0: #{_forward_impl.1}
  #allocation0 [shape = 'u32[]', space=smem, size = 0x4, offset = 0x4, fixed_abs, tag = 'smem constant byte address 0x4 - core index']
  #allocation1 [shape = 'u32[144,128]{1,0:T(1,128)}', space=vmem, size = 0x12000, scoped, tag = 'internal scratch']
  %s0 = inlined_call_operand.vmem [shape: bf16[16,256], index: 0, kind: input, shape index: {}]
  %s1 = inlined_call_operand.vmem [shape: bf16[16,512], index: 1, kind: input, shape index: {}]
  %s2 = inlined_call_operand.hbm [shape: bf16[256,128], index: 2, kind: input, shape index: {}]
  %s3 = inlined_call_operand.vmem [shape: bf16[512,128], index: 3, kind: input, shape index: {}]
  %s4 = inlined_call_operand.vmem [shape: f32[1,128], index: 4, kind: input, shape index: {}]
  %s5 = inlined_call_operand.vmem [shape: bf16[128,128], index: 5, kind: input, shape index: {}]
  %s6 = inlined_call_operand.vmem [shape: f32[1,128], index: 6, kind: input, shape index: {}]
  %s7 = inlined_call_operand.vmem [shape: f32[16,128], index: 7, kind: output, shape index: {}]
  %s8 = sld [smem:[#allocation0]]
  $region42: #{_forward_impl.1} parent=0
    _
  %s10 = ssub.s32 1, %s8
  %s11 = scalar_select 0, %s10, %s8
  $region1: #{_forward_impl.1} parent=0
    #allocation2 [shape = 'u8[65536]{0}', space=vmem, size = 0x10000, scoped, tag = 'input window, operand 2, single buffered']
    #allocation3 [shape = 's32[1]{0}', space=sflag, size = 0x4, scoped, tag = 'scoped memory for _forward_impl.1']
    %12 = vsyncpa [#allocation3], 0
    // Predicated region
    $region2: #{_forward_impl.1} parent=1 // pred_check
      _
    $region3: #{_forward_impl.1} parent=1 // pred_check_branch
      %14 = sbr.rel (0) target = $region5
    $region4: #{_forward_impl.1} parent=1 // pred_region
      _
    $region5: #{_forward_impl.1} parent=1 // pred_fallthru
      _
    // Predicated region
    $region6: #{_forward_impl.1} parent=1 // pred_check
      _
    $region7: #{_forward_impl.1} parent=1 // pred_check_branch
      %16 = sbr.rel (0) target = $region9
    $region8: #{_forward_impl.1} parent=1 // pred_region
      _
    $region9: #{_forward_impl.1} parent=1 // pred_fallthru
      _
    // Predicated region
    $region10: #{_forward_impl.1} parent=1 // pred_check
      _
    $region11: #{_forward_impl.1} parent=1 // pred_check_branch
      %18 = sbr.rel (0) target = $region13
    $region12: #{_forward_impl.1} parent=1 // pred_region
      %s20 = ssub.s32 2048, 2048
      %21 = vsyncadd [#allocation3], %s20
      %s22 = sshll.u32 [#allocation2], 4
      %s23 = int_to_ptr.vmem [resolvable:$true] %s22
      %28 = dma.hbm_to_vmem [thread:$0]  %s2, 2048, %s23, [#allocation3], 64, 64, 4
    $region13: #{_forward_impl.1} parent=1 // pred_fallthru
      _
    // Predicated region
    $region14: #{_forward_impl.1} parent=1 // pred_check
      _
    $region15: #{_forward_impl.1} parent=1 // pred_check_branch
      %30 = sbr.rel (0) target = $region17
    $region16: #{_forward_impl.1} parent=1 // pred_region
      _
    $region17: #{_forward_impl.1} parent=1 // pred_fallthru
      _
    // Predicated region
    $region18: #{_forward_impl.1} parent=1 // pred_check
      _
    $region19: #{_forward_impl.1} parent=1 // pred_check_branch
      %32 = sbr.rel (0) target = $region21
    $region20: #{_forward_impl.1} parent=1 // pred_region
      _
    $region21: #{_forward_impl.1} parent=1 // pred_fallthru
      _
    // Predicated region
    $region22: #{_forward_impl.1} parent=1 // pred_check
      _
    $region23: #{_forward_impl.1} parent=1 // pred_check_branch
      %34 = sbr.rel (0) target = $region25
    $region24: #{_forward_impl.1} parent=1 // pred_region
      _
    $region25: #{_forward_impl.1} parent=1 // pred_fallthru
      _
    // Predicated region
    $region26: #{_forward_impl.1} parent=1 // pred_check
      _
    $region27: #{_forward_impl.1} parent=1 // pred_check_branch
      %36 = sbr.rel (0) target = $region29
    $region28: #{_forward_impl.1} parent=1 // pred_region
      _
    $region29: #{_forward_impl.1} parent=1 // pred_fallthru
      _
    // Predicated region
    $region30: #{_forward_impl.1} parent=1 // pred_check
      _
    $region31: #{_forward_impl.1} parent=1 // pred_check_branch
      %38 = sbr.rel (0) target = $region33
    $region32: #{_forward_impl.1} parent=1 // pred_region
      %39 = dma.done [#allocation3], 2048
    $region33: #{_forward_impl.1} parent=1 // pred_fallthru
      _
    %v41 = vld [vmem:[%s0] sm:$0xff]
    %v42 = vld [vmem:[%s0 + $0x8] sm:$0xff]
    %v43 = vmax.bf16 %v41, 0
    %v44 = vmax.bf16 %v42, 0
    %v45 = vld [vmem:[%s1] sm:$0xff]
    %v46 = vld [vmem:[%s1 + $0x8] sm:$0xff]
    %v47 = vld [vmem:[%s1 + $0x10] sm:$0xff]
    %v48 = vld [vmem:[%s1 + $0x18] sm:$0xff]
    %v49 = vmax.bf16 %v45, 0
    %v50 = vmax.bf16 %v46, 0
    %v51 = vmax.bf16 %v47, 0
    %v52 = vmax.bf16 %v48, 0
    %v53 = vld [vmem:[#allocation2] sm:$0xf]
    %v54 = vld [vmem:[#allocation2 + $0x4] sm:$0xf]
    %v55 = vld [vmem:[#allocation2 + $0x8] sm:$0xf]
    %v56 = vld [vmem:[#allocation2 + $0xc] sm:$0xf]
    %v57 = vld [vmem:[#allocation2 + $0x10] sm:$0xf]
    %v58 = vld [vmem:[#allocation2 + $0x14] sm:$0xf]
    %v59 = vld [vmem:[#allocation2 + $0x18] sm:$0xf]
    %v60 = vld [vmem:[#allocation2 + $0x1c] sm:$0xf]
    %v61 = vld [vmem:[#allocation2 + $0x20] sm:$0xf]
    %v62 = vld [vmem:[#allocation2 + $0x24] sm:$0xf]
    %v63 = vld [vmem:[#allocation2 + $0x28] sm:$0xf]
    %v64 = vld [vmem:[#allocation2 + $0x2c] sm:$0xf]
    %v65 = vld [vmem:[#allocation2 + $0x30] sm:$0xf]
    %v66 = vld [vmem:[#allocation2 + $0x34] sm:$0xf]
    %v67 = vld [vmem:[#allocation2 + $0x38] sm:$0xf]
    %v68 = vld [vmem:[#allocation2 + $0x3c] sm:$0xf]
    %v69 = vld [vmem:[#allocation2 + $0x40] sm:$0xf]
    %v70 = vld [vmem:[#allocation2 + $0x44] sm:$0xf]
    %v71 = vld [vmem:[#allocation2 + $0x48] sm:$0xf]
    %v72 = vld [vmem:[#allocation2 + $0x4c] sm:$0xf]
    %v73 = vld [vmem:[#allocation2 + $0x50] sm:$0xf]
    %v74 = vld [vmem:[#allocation2 + $0x54] sm:$0xf]
    %v75 = vld [vmem:[#allocation2 + $0x58] sm:$0xf]
    %v76 = vld [vmem:[#allocation2 + $0x5c] sm:$0xf]
    %v77 = vld [vmem:[#allocation2 + $0x60] sm:$0xf]
    %v78 = vld [vmem:[#allocation2 + $0x64] sm:$0xf]
    %v79 = vld [vmem:[#allocation2 + $0x68] sm:$0xf]
    %v80 = vld [vmem:[#allocation2 + $0x6c] sm:$0xf]
    %v81 = vld [vmem:[#allocation2 + $0x70] sm:$0xf]
    %v82 = vld [vmem:[#allocation2 + $0x74] sm:$0xf]
    %v83 = vld [vmem:[#allocation2 + $0x78] sm:$0xf]
    %v84 = vld [vmem:[#allocation2 + $0x7c] sm:$0xf]
    %v85 = vld [vmem:[%s3] sm:$0xf]
    %v86 = vld [vmem:[%s3 + $0x4] sm:$0xf]
    %v87 = vld [vmem:[%s3 + $0x8] sm:$0xf]
    %v88 = vld [vmem:[%s3 + $0xc] sm:$0xf]
    %v89 = vld [vmem:[%s3 + $0x10] sm:$0xf]
    %v90 = vld [vmem:[%s3 + $0x14] sm:$0xf]
    %v91 = vld [vmem:[%s3 + $0x18] sm:$0xf]
    %v92 = vld [vmem:[%s3 + $0x1c] sm:$0xf]
    %v93 = vld [vmem:[%s3 + $0x20] sm:$0xf]
    %v94 = vld [vmem:[%s3 + $0x24] sm:$0xf]
    %v95 = vld [vmem:[%s3 + $0x28] sm:$0xf]
    %v96 = vld [vmem:[%s3 + $0x2c] sm:$0xf]
    %v97 = vld [vmem:[%s3 + $0x30] sm:$0xf]
    %v98 = vld [vmem:[%s3 + $0x34] sm:$0xf]
    %v99 = vld [vmem:[%s3 + $0x38] sm:$0xf]
    %v100 = vld [vmem:[%s3 + $0x3c] sm:$0xf]
    %v101 = vld [vmem:[%s3 + $0x40] sm:$0xf]
    %v102 = vld [vmem:[%s3 + $0x44] sm:$0xf]
    %v103 = vld [vmem:[%s3 + $0x48] sm:$0xf]
    %v104 = vld [vmem:[%s3 + $0x4c] sm:$0xf]
    %v105 = vld [vmem:[%s3 + $0x50] sm:$0xf]
    %v106 = vld [vmem:[%s3 + $0x54] sm:$0xf]
    %v107 = vld [vmem:[%s3 + $0x58] sm:$0xf]
    %v108 = vld [vmem:[%s3 + $0x5c] sm:$0xf]
    %v109 = vld [vmem:[%s3 + $0x60] sm:$0xf]
    %v110 = vld [vmem:[%s3 + $0x64] sm:$0xf]
    %v111 = vld [vmem:[%s3 + $0x68] sm:$0xf]
    %v112 = vld [vmem:[%s3 + $0x6c] sm:$0xf]
    %v113 = vld [vmem:[%s3 + $0x70] sm:$0xf]
    %v114 = vld [vmem:[%s3 + $0x74] sm:$0xf]
    %v115 = vld [vmem:[%s3 + $0x78] sm:$0xf]
    %v116 = vld [vmem:[%s3 + $0x7c] sm:$0xf]
    %v117 = vld [vmem:[%s3 + $0x80] sm:$0xf]
    %v118 = vld [vmem:[%s3 + $0x84] sm:$0xf]
    %v119 = vld [vmem:[%s3 + $0x88] sm:$0xf]
    %v120 = vld [vmem:[%s3 + $0x8c] sm:$0xf]
    %v121 = vld [vmem:[%s3 + $0x90] sm:$0xf]
    %v122 = vld [vmem:[%s3 + $0x94] sm:$0xf]
    %v123 = vld [vmem:[%s3 + $0x98] sm:$0xf]
    %v124 = vld [vmem:[%s3 + $0x9c] sm:$0xf]
    %v125 = vld [vmem:[%s3 + $0xa0] sm:$0xf]
    %v126 = vld [vmem:[%s3 + $0xa4] sm:$0xf]
    %v127 = vld [vmem:[%s3 + $0xa8] sm:$0xf]
    %v128 = vld [vmem:[%s3 + $0xac] sm:$0xf]
    %v129 = vld [vmem:[%s3 + $0xb0] sm:$0xf]
    %v130 = vld [vmem:[%s3 + $0xb4] sm:$0xf]
    %v131 = vld [vmem:[%s3 + $0xb8] sm:$0xf]
    %v132 = vld [vmem:[%s3 + $0xbc] sm:$0xf]
    %v133 = vld [vmem:[%s3 + $0xc0] sm:$0xf]
    %v134 = vld [vmem:[%s3 + $0xc4] sm:$0xf]
    %v135 = vld [vmem:[%s3 + $0xc8] sm:$0xf]
    %v136 = vld [vmem:[%s3 + $0xcc] sm:$0xf]
    %v137 = vld [vmem:[%s3 + $0xd0] sm:$0xf]
    %v138 = vld [vmem:[%s3 + $0xd4] sm:$0xf]
    %v139 = vld [vmem:[%s3 + $0xd8] sm:$0xf]
    %v140 = vld [vmem:[%s3 + $0xdc] sm:$0xf]
    %v141 = vld [vmem:[%s3 + $0xe0] sm:$0xf]
    %v142 = vld [vmem:[%s3 + $0xe4] sm:$0xf]
    %v143 = vld [vmem:[%s3 + $0xe8] sm:$0xf]
    %v144 = vld [vmem:[%s3 + $0xec] sm:$0xf]
    %v145 = vld [vmem:[%s3 + $0xf0] sm:$0xf]
    %v146 = vld [vmem:[%s3 + $0xf4] sm:$0xf]
    %v147 = vld [vmem:[%s3 + $0xf8] sm:$0xf]
    %v148 = vld [vmem:[%s3 + $0xfc] sm:$0xf]
    %v153 = vunpack.c.l.b16 %v49
    %v154 = vunpack.c.h.b16 %v49
    %v155 = vunpack.c.l.b16 %v50
    %v156 = vunpack.c.h.b16 %v50
    %v157 = vunpack.c.l.b16 %v51
    %v158 = vunpack.c.h.b16 %v51
    %v159 = vunpack.c.l.b16 %v52
    %v160 = vunpack.c.h.b16 %v52
    %v161 = vpack.c.b16 %v157, %v153
    %v162 = vpack.c.b16 %v158, %v154
    %v163 = vpack.c.b16 %v159, %v155
    %v164 = vpack.c.b16 %v160, %v156
    %v233 = vunpack.c.l.b16 %v85
    %v234 = vunpack.c.l.b16 %v86
    %v235 = vunpack.c.l.b16 %v87
    %v236 = vunpack.c.l.b16 %v88
    %v237 = vunpack.c.l.b16 %v89
    %v238 = vunpack.c.l.b16 %v90
    %v239 = vunpack.c.l.b16 %v91
    %v240 = vunpack.c.l.b16 %v92
    %v241 = vunpack.c.l.b16 %v93
    %v242 = vunpack.c.l.b16 %v94
    %v243 = vunpack.c.l.b16 %v95
    %v244 = vunpack.c.l.b16 %v96
    %v245 = vunpack.c.l.b16 %v97
    %v246 = vunpack.c.l.b16 %v98
    %v247 = vunpack.c.l.b16 %v99
    %v248 = vunpack.c.l.b16 %v100
    %v249 = vunpack.c.l.b16 %v101
    %v250 = vunpack.c.l.b16 %v102
    %v251 = vunpack.c.l.b16 %v103
    %v252 = vunpack.c.l.b16 %v104
    %v253 = vunpack.c.l.b16 %v105
    %v254 = vunpack.c.l.b16 %v106
    %v255 = vunpack.c.l.b16 %v107
    %v256 = vunpack.c.l.b16 %v108
    %v257 = vunpack.c.l.b16 %v109
    %v258 = vunpack.c.l.b16 %v110
    %v259 = vunpack.c.l.b16 %v111
    %v260 = vunpack.c.l.b16 %v112
    %v261 = vunpack.c.l.b16 %v113
    %v262 = vunpack.c.l.b16 %v114
    %v263 = vunpack.c.l.b16 %v115
    %v264 = vunpack.c.l.b16 %v116
    %v265 = vunpack.c.l.b16 %v117
    %v266 = vunpack.c.l.b16 %v118
    %v267 = vunpack.c.l.b16 %v119
    %v268 = vunpack.c.l.b16 %v120
    %v269 = vunpack.c.l.b16 %v121
    %v270 = vunpack.c.l.b16 %v122
    %v271 = vunpack.c.l.b16 %v123
    %v272 = vunpack.c.l.b16 %v124
    %v273 = vunpack.c.l.b16 %v125
    %v274 = vunpack.c.l.b16 %v126
    %v275 = vunpack.c.l.b16 %v127
    %v276 = vunpack.c.l.b16 %v128
    %v277 = vunpack.c.l.b16 %v129
    %v278 = vunpack.c.l.b16 %v130
    %v279 = vunpack.c.l.b16 %v131
    %v280 = vunpack.c.l.b16 %v132
    %v281 = vunpack.c.l.b16 %v133
    %v282 = vunpack.c.l.b16 %v134
    %v283 = vunpack.c.l.b16 %v135
    %v284 = vunpack.c.l.b16 %v136
    %v285 = vunpack.c.l.b16 %v137
    %v286 = vunpack.c.l.b16 %v138
    %v287 = vunpack.c.l.b16 %v139
    %v288 = vunpack.c.l.b16 %v140
    %v289 = vunpack.c.l.b16 %v141
    %v290 = vunpack.c.l.b16 %v142
    %v291 = vunpack.c.l.b16 %v143
    %v292 = vunpack.c.l.b16 %v144
    %v293 = vunpack.c.l.b16 %v145
    %v294 = vunpack.c.l.b16 %v146
    %v295 = vunpack.c.l.b16 %v147
    %v296 = vunpack.c.l.b16 %v148
    %v297 = vpack.c.b16 %v234, %v233
    %v298 = vpack.c.b16 %v236, %v235
    %v299 = vpack.c.b16 %v238, %v237
    %v300 = vpack.c.b16 %v240, %v239
    %v301 = vpack.c.b16 %v242, %v241
    %v302 = vpack.c.b16 %v244, %v243
    %v303 = vpack.c.b16 %v246, %v245
    %v304 = vpack.c.b16 %v248, %v247
    %v305 = vpack.c.b16 %v250, %v249
    %v306 = vpack.c.b16 %v252, %v251
    %v307 = vpack.c.b16 %v254, %v253
    %v308 = vpack.c.b16 %v256, %v255
    %v309 = vpack.c.b16 %v258, %v257
    %v310 = vpack.c.b16 %v260, %v259
    %v311 = vpack.c.b16 %v262, %v261
    %v312 = vpack.c.b16 %v264, %v263
    %v313 = vpack.c.b16 %v266, %v265
    %v314 = vpack.c.b16 %v268, %v267
    %v315 = vpack.c.b16 %v270, %v269
    %v316 = vpack.c.b16 %v272, %v271
    %v317 = vpack.c.b16 %v274, %v273
    %v318 = vpack.c.b16 %v276, %v275
    %v319 = vpack.c.b16 %v278, %v277
    %v320 = vpack.c.b16 %v280, %v279
    %v321 = vpack.c.b16 %v282, %v281
    %v322 = vpack.c.b16 %v284, %v283
    %v323 = vpack.c.b16 %v286, %v285
    %v324 = vpack.c.b16 %v288, %v287
    %v325 = vpack.c.b16 %v290, %v289
    %v326 = vpack.c.b16 %v292, %v291
    %v327 = vpack.c.b16 %v294, %v293
    %v328 = vpack.c.b16 %v296, %v295
    %361 = vmatprep.subr.bf16.mxu0 0
    %362 = vmatpush1.bf16.msra.mxu0 %v304
    %363 = vmatprep.subr.bf16.mxu0 0
    %364 = vmatpush1.bf16.msra.mxu0 %v303
    %365 = vmatprep.subr.bf16.mxu0 0
    %366 = vmatpush1.bf16.msra.mxu0 %v302
    %367 = vmatprep.subr.bf16.mxu0 0
    %368 = vmatpush1.bf16.msra.mxu0 %v301
    %369 = vmatprep.subr.bf16.mxu0 0
    %370 = vmatpush1.bf16.msra.mxu0 %v300
    %371 = vmatprep.subr.bf16.mxu0 0
    %372 = vmatpush1.bf16.msra.mxu0 %v299
    %373 = vmatprep.subr.bf16.mxu0 0
    %374 = vmatpush1.bf16.msra.mxu0 %v298
    %375 = vmatprep.subr.bf16.mxu0 0
    %376 = vmatpush1.bf16.msra.mxu0 %v297
    %377 = vmatprep.subr.bf16.mxu0 0
    %378 = vmatpush2.bf16.msra.mxu0 %v312
    %379 = vmatprep.subr.bf16.mxu0 0
    %380 = vmatpush2.bf16.msra.mxu0 %v311
    %381 = vmatprep.subr.bf16.mxu0 0
    %382 = vmatpush2.bf16.msra.mxu0 %v310
    %383 = vmatprep.subr.bf16.mxu0 0
    %384 = vmatpush2.bf16.msra.mxu0 %v309
    %385 = vmatprep.subr.bf16.mxu0 0
    %386 = vmatpush2.bf16.msra.mxu0 %v308
    %387 = vmatprep.subr.bf16.mxu0 0
    %388 = vmatpush2.bf16.msra.mxu0 %v307
    %389 = vmatprep.subr.bf16.mxu0 0
    %390 = vmatpush2.bf16.msra.mxu0 %v306
    %391 = vmatprep.subr.bf16.mxu0 0
    %392 = vmatpush2.bf16.msra.mxu0 %v305
    %393 = vmatprep.mubr.bf16.mxu0 %v162
    %394 = vmatmul.mubr.bf16.gmra.mxu0 %v161
    %v395 = vpop.f32.mrf.mxu0
    %v396 = vadd.f32 0.0, %v395
    %v397 = vpop.f32.mrf.mxu0
    %v398 = vpop.f32.mrf.mxu0
    %v399 = vadd.f32 0.0, %v398
    %v400 = vpop.f32.mrf.mxu0
    %401 = vdwg.mxu0
    %402 = vmatprep.subr.bf16.mxu0 0
    %403 = vmatpush1.bf16.msra.mxu0 %v320
    %404 = vmatprep.subr.bf16.mxu0 0
    %405 = vmatpush1.bf16.msra.mxu0 %v319
    %406 = vmatprep.subr.bf16.mxu0 0
    %407 = vmatpush1.bf16.msra.mxu0 %v318
    %408 = vmatprep.subr.bf16.mxu0 0
    %409 = vmatpush1.bf16.msra.mxu0 %v317
    %410 = vmatprep.subr.bf16.mxu0 0
    %411 = vmatpush1.bf16.msra.mxu0 %v316
    %412 = vmatprep.subr.bf16.mxu0 0
    %413 = vmatpush1.bf16.msra.mxu0 %v315
    %414 = vmatprep.subr.bf16.mxu0 0
    %415 = vmatpush1.bf16.msra.mxu0 %v314
    %416 = vmatprep.subr.bf16.mxu0 0
    %417 = vmatpush1.bf16.msra.mxu0 %v313
    %418 = vmatprep.subr.bf16.mxu0 0
    %419 = vmatpush2.bf16.msra.mxu0 %v328
    %420 = vmatprep.subr.bf16.mxu0 0
    %421 = vmatpush2.bf16.msra.mxu0 %v327
    %422 = vmatprep.subr.bf16.mxu0 0
    %423 = vmatpush2.bf16.msra.mxu0 %v326
    %424 = vmatprep.subr.bf16.mxu0 0
    %425 = vmatpush2.bf16.msra.mxu0 %v325
    %426 = vmatprep.subr.bf16.mxu0 0
    %427 = vmatpush2.bf16.msra.mxu0 %v324
    %428 = vmatprep.subr.bf16.mxu0 0
    %429 = vmatpush2.bf16.msra.mxu0 %v323
    %430 = vmatprep.subr.bf16.mxu0 0
    %431 = vmatpush2.bf16.msra.mxu0 %v322
    %432 = vmatprep.subr.bf16.mxu0 0
    %433 = vmatpush2.bf16.msra.mxu0 %v321
    %434 = vmatprep.mubr.bf16.mxu0 %v164
    %435 = vmatmul.mubr.bf16.gmra.mxu0 %v163
    %v436 = vpop.f32.mrf.mxu0
    %v437 = vadd.f32 %v396, %v436
    %v438 = vpop.f32.mrf.mxu0
    %v439 = vpop.f32.mrf.mxu0
    %v440 = vadd.f32 %v399, %v439
    %v441 = vpop.f32.mrf.mxu0
    %442 = vdwg.mxu0
    %v445 = vunpack.c.l.b16 %v43
    %v446 = vunpack.c.h.b16 %v43
    %v447 = vunpack.c.l.b16 %v44
    %v448 = vunpack.c.h.b16 %v44
    %v449 = vpack.c.b16 %v447, %v445
    %v450 = vpack.c.b16 %v448, %v446
    %v485 = vunpack.c.l.b16 %v53
    %v486 = vunpack.c.l.b16 %v54
    %v487 = vunpack.c.l.b16 %v55
    %v488 = vunpack.c.l.b16 %v56
    %v489 = vunpack.c.l.b16 %v57
    %v490 = vunpack.c.l.b16 %v58
    %v491 = vunpack.c.l.b16 %v59
    %v492 = vunpack.c.l.b16 %v60
    %v493 = vunpack.c.l.b16 %v61
    %v494 = vunpack.c.l.b16 %v62
    %v495 = vunpack.c.l.b16 %v63
    %v496 = vunpack.c.l.b16 %v64
    %v497 = vunpack.c.l.b16 %v65
    %v498 = vunpack.c.l.b16 %v66
    %v499 = vunpack.c.l.b16 %v67
    %v500 = vunpack.c.l.b16 %v68
    %v501 = vunpack.c.l.b16 %v69
    %v502 = vunpack.c.l.b16 %v70
    %v503 = vunpack.c.l.b16 %v71
    %v504 = vunpack.c.l.b16 %v72
    %v505 = vunpack.c.l.b16 %v73
    %v506 = vunpack.c.l.b16 %v74
    %v507 = vunpack.c.l.b16 %v75
    %v508 = vunpack.c.l.b16 %v76
    %v509 = vunpack.c.l.b16 %v77
    %v510 = vunpack.c.l.b16 %v78
    %v511 = vunpack.c.l.b16 %v79
    %v512 = vunpack.c.l.b16 %v80
    %v513 = vunpack.c.l.b16 %v81
    %v514 = vunpack.c.l.b16 %v82
    %v515 = vunpack.c.l.b16 %v83
    %v516 = vunpack.c.l.b16 %v84
    %v517 = vpack.c.b16 %v486, %v485
    %v518 = vpack.c.b16 %v488, %v487
    %v519 = vpack.c.b16 %v490, %v489
    %v520 = vpack.c.b16 %v492, %v491
    %v521 = vpack.c.b16 %v494, %v493
    %v522 = vpack.c.b16 %v496, %v495
    %v523 = vpack.c.b16 %v498, %v497
    %v524 = vpack.c.b16 %v500, %v499
    %v525 = vpack.c.b16 %v502, %v501
    %v526 = vpack.c.b16 %v504, %v503
    %v527 = vpack.c.b16 %v506, %v505
    %v528 = vpack.c.b16 %v508, %v507
    %v529 = vpack.c.b16 %v510, %v509
    %v530 = vpack.c.b16 %v512, %v511
    %v531 = vpack.c.b16 %v514, %v513
    %v532 = vpack.c.b16 %v516, %v515
    %549 = vmatprep.subr.bf16.mxu0 0
    %550 = vmatpush1.bf16.msra.mxu0 %v524
    %551 = vmatprep.subr.bf16.mxu0 0
    %552 = vmatpush1.bf16.msra.mxu0 %v523
    %553 = vmatprep.subr.bf16.mxu0 0
    %554 = vmatpush1.bf16.msra.mxu0 %v522
    %555 = vmatprep.subr.bf16.mxu0 0
    %556 = vmatpush1.bf16.msra.mxu0 %v521
    %557 = vmatprep.subr.bf16.mxu0 0
    %558 = vmatpush1.bf16.msra.mxu0 %v520
    %559 = vmatprep.subr.bf16.mxu0 0
    %560 = vmatpush1.bf16.msra.mxu0 %v519
    %561 = vmatprep.subr.bf16.mxu0 0
    %562 = vmatpush1.bf16.msra.mxu0 %v518
    %563 = vmatprep.subr.bf16.mxu0 0
    %564 = vmatpush1.bf16.msra.mxu0 %v517
    %565 = vmatprep.subr.bf16.mxu0 0
    %566 = vmatpush2.bf16.msra.mxu0 %v532
    %567 = vmatprep.subr.bf16.mxu0 0
    %568 = vmatpush2.bf16.msra.mxu0 %v531
    %569 = vmatprep.subr.bf16.mxu0 0
    %570 = vmatpush2.bf16.msra.mxu0 %v530
    %571 = vmatprep.subr.bf16.mxu0 0
    %572 = vmatpush2.bf16.msra.mxu0 %v529
    %573 = vmatprep.subr.bf16.mxu0 0
    %574 = vmatpush2.bf16.msra.mxu0 %v528
    %575 = vmatprep.subr.bf16.mxu0 0
    %576 = vmatpush2.bf16.msra.mxu0 %v527
    %577 = vmatprep.subr.bf16.mxu0 0
    %578 = vmatpush2.bf16.msra.mxu0 %v526
    %579 = vmatprep.subr.bf16.mxu0 0
    %580 = vmatpush2.bf16.msra.mxu0 %v525
    %581 = vmatprep.mubr.bf16.mxu0 %v450
    %582 = vmatmul.mubr.bf16.gmra.mxu0 %v449
    %v583 = vpop.f32.mrf.mxu0
    %v584 = vadd.f32 %v437, %v583
    %v585 = vpop.f32.mrf.mxu0
    %v586 = vpop.f32.mrf.mxu0
    %v587 = vadd.f32 %v440, %v586
    %v588 = vpop.f32.mrf.mxu0
    %589 = vdwg.mxu0
    %v590 = vld [vmem:[%s4] sm:$0x1]
    %v592 = vlaneseq
    %v593 = vshrl.u32 %v592, 7
    %v594 = vsub.s32 0, %v593
    %v595 = vrot.slane %v590, %v594
    %v597 = vadd.f32 %v584, %v595
    %v598 = vadd.f32 %v587, %v595
    %v599 = vmax.f32 %v597, 0.0
    %v600 = vmax.f32 %v598, 0.0
    %v601 = vpack.c.bf16 %v600, %v599
    %v602 = vld [vmem:[%s5] sm:$0xf]
    %v603 = vld [vmem:[%s5 + $0x4] sm:$0xf]
    %v604 = vld [vmem:[%s5 + $0x8] sm:$0xf]
    %v605 = vld [vmem:[%s5 + $0xc] sm:$0xf]
    %v606 = vld [vmem:[%s5 + $0x10] sm:$0xf]
    %v607 = vld [vmem:[%s5 + $0x14] sm:$0xf]
    %v608 = vld [vmem:[%s5 + $0x18] sm:$0xf]
    %v609 = vld [vmem:[%s5 + $0x1c] sm:$0xf]
    %v610 = vld [vmem:[%s5 + $0x20] sm:$0xf]
    %v611 = vld [vmem:[%s5 + $0x24] sm:$0xf]
    %v612 = vld [vmem:[%s5 + $0x28] sm:$0xf]
    %v613 = vld [vmem:[%s5 + $0x2c] sm:$0xf]
    %v614 = vld [vmem:[%s5 + $0x30] sm:$0xf]
    %v615 = vld [vmem:[%s5 + $0x34] sm:$0xf]
    %v616 = vld [vmem:[%s5 + $0x38] sm:$0xf]
    %v617 = vld [vmem:[%s5 + $0x3c] sm:$0xf]
    %v618 = vld [vmem:[%s6] sm:$0x1]
    %v620 = vlaneseq
    %v621 = vshrl.u32 %v620, 7
    %v622 = vsub.s32 0, %v621
    %v623 = vrot.slane %v618, %v622
    %v641 = vunpack.c.l.b16 %v602
    %v642 = vunpack.c.l.b16 %v603
    %v643 = vunpack.c.l.b16 %v604
    %v644 = vunpack.c.l.b16 %v605
    %v645 = vunpack.c.l.b16 %v606
    %v646 = vunpack.c.l.b16 %v607
    %v647 = vunpack.c.l.b16 %v608
    %v648 = vunpack.c.l.b16 %v609
    %v649 = vunpack.c.l.b16 %v610
    %v650 = vunpack.c.l.b16 %v611
    %v651 = vunpack.c.l.b16 %v612
    %v652 = vunpack.c.l.b16 %v613
    %v653 = vunpack.c.l.b16 %v614
    %v654 = vunpack.c.l.b16 %v615
    %v655 = vunpack.c.l.b16 %v616
    %v656 = vunpack.c.l.b16 %v617
    %v657 = vpack.c.b16 %v642, %v641
    %v658 = vpack.c.b16 %v644, %v643
    %v659 = vpack.c.b16 %v646, %v645
    %v660 = vpack.c.b16 %v648, %v647
    %v661 = vpack.c.b16 %v650, %v649
    %v662 = vpack.c.b16 %v652, %v651
    %v663 = vpack.c.b16 %v654, %v653
    %v664 = vpack.c.b16 %v656, %v655
    %673 = vmatprep.subr.bf16.mxu0 0
    %674 = vmatpush1.bf16.msra.mxu0 %v664
    %675 = vmatprep.subr.bf16.mxu0 0
    %676 = vmatpush1.bf16.msra.mxu0 %v663
    %677 = vmatprep.subr.bf16.mxu0 0
    %678 = vmatpush1.bf16.msra.mxu0 %v662
    %679 = vmatprep.subr.bf16.mxu0 0
    %680 = vmatpush1.bf16.msra.mxu0 %v661
    %681 = vmatprep.subr.bf16.mxu0 0
    %682 = vmatpush1.bf16.msra.mxu0 %v660
    %683 = vmatprep.subr.bf16.mxu0 0
    %684 = vmatpush1.bf16.msra.mxu0 %v659
    %685 = vmatprep.subr.bf16.mxu0 0
    %686 = vmatpush1.bf16.msra.mxu0 %v658
    %687 = vmatprep.subr.bf16.mxu0 0
    %688 = vmatpush1.bf16.msra.mxu0 %v657
    %689 = vmatprep.subr.bf16.mxu0 0
    %690 = vmatpush2.bf16.msra.mxu0 0
    %691 = vmatprep.subr.bf16.mxu0 0
    %692 = vmatpush2.bf16.msra.mxu0 0
    %693 = vmatprep.subr.bf16.mxu0 0
    %694 = vmatpush2.bf16.msra.mxu0 0
    %695 = vmatprep.subr.bf16.mxu0 0
    %696 = vmatpush2.bf16.msra.mxu0 0
    %697 = vmatprep.subr.bf16.mxu0 0
    %698 = vmatpush2.bf16.msra.mxu0 0
    %699 = vmatprep.subr.bf16.mxu0 0
    %700 = vmatpush2.bf16.msra.mxu0 0
    %701 = vmatprep.subr.bf16.mxu0 0
    %702 = vmatpush2.bf16.msra.mxu0 0
    %703 = vmatprep.subr.bf16.mxu0 0
    %704 = vmatpush2.bf16.msra.mxu0 0
    %705 = vmatprep.mubr.bf16.mxu0 0
    %706 = vmatmul.mubr.bf16.gmra.mxu0 %v601
    %v707 = vpop.f32.mrf.mxu0
    %v708 = vadd.f32 %v623, %v707
    %v709 = vpop.f32.mrf.mxu0
    %v710 = vpop.f32.mrf.mxu0
    %v711 = vadd.f32 %v623, %v710
    %v712 = vpop.f32.mrf.mxu0
    %713 = vdwg.mxu0
    %714 = vmax.xlane.f32.xlu0 %v708
    %v715 = vpop.xlane.xlu0 %714
    %716 = vmax.xlane.f32.xlu0 %v711
    %v717 = vpop.xlane.xlu0 %716
    %v718 = vsub.f32 %v708, %v715
    %v719 = vsub.f32 %v711, %v717
    %v720 = vmul.f32 %v718, 1.442695
    %v721 = vpow.pop %v720
    %v722 = vmul.f32 %v719, 1.442695
    %v723 = vpow.pop %v722
    %724 = vadd.xlane.f32.xlu0 %v721
    %v725 = vpop.xlane.xlu0 %724
    %726 = vadd.xlane.f32.xlu0 %v723
    %v727 = vpop.xlane.xlu0 %726
    %v728 = vrcp.pop %v725
    %v729 = vrcp.pop %v727
    %v730 = vmul.f32 %v721, %v728
    %v731 = vmul.f32 %v723, %v729
    %732 = vst [vmem:[%s7] sm:$0xff] %v730
    %733 = vst [vmem:[%s7 + $0x8] sm:$0xff] %v731
    // Predicated region
    $region34: #{_forward_impl.1} parent=1 // pred_check
      _
    $region35: #{_forward_impl.1} parent=1 // pred_check_branch
      %735 = sbr.rel (0) target = $region37
    $region36: #{_forward_impl.1} parent=1 // pred_region
      _
    $region37: #{_forward_impl.1} parent=1 // pred_fallthru
      _
    // Predicated region
    $region38: #{_forward_impl.1} parent=1 // pred_check
      _
    $region39: #{_forward_impl.1} parent=1 // pred_check_branch
      %737 = sbr.rel (0) target = $region41
    $region40: #{_forward_impl.1} parent=1 // pred_region
      _
    $region41: #{_forward_impl.1} parent=1 // pred_fallthru
      _
    %738 = vsyncpa [#allocation3], 1

</llo_original>
